<compile_context>
chip_gen: v7x
topology: tpu7x:2x2x1
jax: 0.10.0
libtpu: 0.0.40
codegen_flags: <defaults>
</compile_context>

<pallas_src>
import jax
import jax.numpy as jnp
import numpy as np
from jax.experimental import pallas as pl
from jax.experimental.pallas import tpu as pltpu


def _control_attention_kernel(x_ref, rt_ref, w_ref, b_ref, o_ref):
    # x_ref : (N, TB)    VMEM  inputs: neurons on sublanes, samples on lanes
    # rt_ref: (F, N, TB) VMEM  R^T block (feature-major)
    # w_ref : (F,)       SMEM  fc weight
    # b_ref : (1,)       SMEM  fc bias
    # o_ref : (N, TB)    VMEM  exp(x*fc(R) - per-sample max)
    f_dim = rt_ref.shape[0]
    # fc(R): weight[i, b] = sum_f R^T[f, i, b] * w[f] + bias.
    # F-outer static loop of scalar-splat multiply-adds over dense (N, TB)
    # slabs: pure VPU work (kept off the MXU on purpose — kernel is HBM bound).
    acc = rt_ref[0] * w_ref[0]
    for f in range(1, f_dim):
        acc = acc + rt_ref[f] * w_ref[f]
    weight = acc + b_ref[0]
    s = x_ref[...] * weight                         # (N, TB) == input * weight
    m = jnp.max(s, axis=0, keepdims=True)           # per-sample max over neurons
    o_ref[...] = jnp.exp(s - m)


def _round_up(x, m):
    return ((x + m - 1) // m) * m


def _choose_block_b(b, n, f):
    """Batch (lane) tile: as large as a conservative VMEM budget allows
    (double-buffered r_t + x + out blocks), a multiple of 128, and leaving
    >= 2 grid steps when the batch is big enough (v7x has 2 TensorCores)."""
    per_sample_bytes = 4 * (f * n + 2 * n)            # r_t + x + out, f32
    budget = 10 * 1024 * 1024                         # per live block set
    tb = max(128, (budget // per_sample_bytes) // 128 * 128)
    b128 = _round_up(max(b, 1), 128)
    if tb >= b128:
        tb = b128 if b128 < 256 else _round_up(b128 // 2, 128)
    return tb


def control_attention_t(x_t, r_t, fc_w, fc_b, *, block_b=None):
    """ControlAttention.forward in the lane-friendly (transposed) layout.

    x_t : (N, B)     per-sample inputs, samples on the minor axis
    r_t : (F, N, B)  producer-emitted R^T (no host transpose needed)
    fc_w: (F,)       nn.Linear(F, 1) weight
    fc_b: ()         nn.Linear(F, 1) bias
    returns (N, B)   exp(input*fc(R) - per-sample max), same layout as x_t
    """
    n, b = x_t.shape
    f = r_t.shape[0]
    assert r_t.shape == (f, n, b)

    x_t = jnp.asarray(x_t, jnp.float32)
    r_t = jnp.asarray(r_t, jnp.float32)
    w_arr = jnp.asarray(fc_w, jnp.float32).reshape(f)
    b_arr = jnp.asarray(fc_b, jnp.float32).reshape(1)

    tb = _choose_block_b(b, n, f) if block_b is None else block_b
    b_pad = _round_up(b, tb)
    if b_pad != b:
        # Padded samples are independent; zero padding yields finite exp(0)=1
        # values that are sliced away below.  Producers with B % TB == 0 skip
        # this copy entirely.
        x_t = jnp.pad(x_t, ((0, 0), (0, b_pad - b)))
        r_t = jnp.pad(r_t, ((0, 0), (0, 0), (0, b_pad - b)))
    nb = b_pad // tb

    # Explicit VMEM limit: ~2x double-buffered blocks + temporaries, clamped to
    # stay inside v7x's 64 MiB physical VMEM (also fine on v5e/v6e).
    block_bytes = 4 * tb * (f * n + 2 * n)
    vmem_limit = int(min(max(4 * block_bytes, 32 * 1024 * 1024),
                         48 * 1024 * 1024))

    cost = pl.CostEstimate(
        flops=2 * b_pad * n * (f + 1),
        transcendentals=b_pad * n,
        bytes_accessed=4 * b_pad * n * (f + 2),
    )

    out = pl.pallas_call(
        _control_attention_kernel,
        grid=(nb,),
        in_specs=[
            pl.BlockSpec((n, tb), lambda i: (0, i)),
            pl.BlockSpec((f, n, tb), lambda i: (0, 0, i)),
            pl.BlockSpec(memory_space=pltpu.MemorySpace.SMEM),   # fc weight
            pl.BlockSpec(memory_space=pltpu.MemorySpace.SMEM),   # fc bias
        ],
        out_specs=pl.BlockSpec((n, tb), lambda i: (0, i)),
        out_shape=jax.ShapeDtypeStruct((n, b_pad), jnp.float32),
        compiler_params=pltpu.CompilerParams(
            dimension_semantics=("parallel",),
            vmem_limit_bytes=vmem_limit),
        cost_estimate=cost,
    )(x_t, r_t, w_arr, b_arr)
    return out[:, :b]


def control_attention_batched(x, R, fc_w, fc_b, *, block_b=None):
    """Torch-layout compatibility path: x (B, N), R (B, N, F) -> (B, N).

    NOTE: pays a host-side transpose of R into the lane-friendly layout;
    producers that can emit R^T (F, N, B) directly should call
    control_attention_t to avoid the extra HBM pass over R.
    """
    x_t = jnp.swapaxes(jnp.asarray(x, jnp.float32), 0, 1)          # (N, B)
    r_t = jnp.transpose(jnp.asarray(R, jnp.float32), (2, 1, 0))    # (F, N, B)
    out_t = control_attention_t(x_t, r_t, fc_w, fc_b, block_b=block_b)
    return jnp.swapaxes(out_t, 0, 1)


def control_attention(x, R, fc_w, fc_b):
    """Single-sample torch API: x (n,), R (n, F) -> (n, 1) like the module."""
    n = x.shape[0]
    f = R.shape[1]
    x_t = jnp.asarray(x, jnp.float32).reshape(n, 1)
    r_t = jnp.transpose(jnp.asarray(R, jnp.float32)).reshape(f, n, 1)
    return control_attention_t(x_t, r_t, fc_w, fc_b).reshape(n, 1)


def _reference(x, R, fc_w, fc_b):
    # plain-JAX replica of the PyTorch forward (single sample).
    weight = R @ jnp.reshape(fc_w, (-1, 1)) + fc_b       # (n, 1)
    s = jnp.reshape(x, (-1, 1)) * weight
    return jnp.exp(s - jnp.max(s))


if __name__ == "__main__":
    B, N_UNITS, IN_FEATURES = 2, 16, 16

    key = jax.random.PRNGKey(0)
    kx, kr, kw, kb = jax.random.split(key, 4)

    # The "producer" emits the lane-friendly transposed layout directly
    # (x^T: (N, B), R^T: (F, N, B)) — no swapaxes in the compute path.
    x_t = jax.random.normal(kx, (N_UNITS, B), jnp.float32)
    r_t = jax.random.normal(kr, (IN_FEATURES, N_UNITS, B), jnp.float32)
    bound = float(IN_FEATURES) ** -0.5                  # nn.Linear default init
    fc_w = jax.random.uniform(kw, (IN_FEATURES,), jnp.float32, -bound, bound)
    fc_b = jax.random.uniform(kb, (), jnp.float32, -bound, bound)

    fwd = jax.jit(control_attention_t)
    att_t = fwd(x_t, r_t, fc_w, fc_b)                   # (N, B)
    jax.block_until_ready(att_t)

    assert att_t.shape == (N_UNITS, B)
    assert bool(jnp.all(jnp.isfinite(att_t)))

    # torch-layout views of the same data, for correctness checking only
    x = jnp.swapaxes(x_t, 0, 1)                         # (B, N)
    R = jnp.transpose(r_t, (2, 1, 0))                   # (B, N, F)
    for i in range(B):
        ref = _reference(x[i], R[i], fc_w, fc_b).reshape(N_UNITS)
        np.testing.assert_allclose(np.asarray(att_t[:, i]), np.asarray(ref),
                                   rtol=1e-4, atol=1e-4)

    # torch-layout batched compatibility path
    att_b = jax.jit(control_attention_batched)(x, R, fc_w, fc_b)
    jax.block_until_ready(att_b)
    np.testing.assert_allclose(np.asarray(att_b),
                               np.asarray(jnp.swapaxes(att_t, 0, 1)),
                               rtol=1e-5, atol=1e-5)

    # single-sample path matching torch's (n, 1) return shape
    single = control_attention(x[0], R[0], fc_w, fc_b)
    jax.block_until_ready(single)
    assert single.shape == (N_UNITS, 1)
    np.testing.assert_allclose(np.asarray(single).reshape(-1),
                               np.asarray(att_t[:, 0]), rtol=1e-4, atol=1e-4)

    print("KERNEL_OK")
</pallas_src>

<mosaic_0001>
module attributes {stable_mosaic.version = 11 : i64} {
  func.func @_control_attention_kernel(%arg0: i32, %arg1: memref<16x128xf32, #tpu.memory_space<vmem>>, %arg2: memref<16x16x128xf32, #tpu.memory_space<vmem>>, %arg3: memref<16xf32, #tpu.memory_space<smem>>, %arg4: memref<1xf32, #tpu.memory_space<smem>>, %arg5: memref<16x128xf32, #tpu.memory_space<vmem>>) attributes {dimension_semantics = [#tpu.dimension_semantics<parallel>], iteration_bounds = array<i64: 1>, scalar_prefetch = 0 : i64, scratch_operands = 0 : i64, tpu.core_type = #tpu.core_type<tc>, window_params = [{transform_indices = @transform_0, window_bounds = array<i64: 16, 128>}, {transform_indices = @transform_1, window_bounds = array<i64: 16, 16, 128>}, {transform_indices = @transform_2, window_bounds = array<i64: 16>}, {transform_indices = @transform_3, window_bounds = array<i64: 1>}, {transform_indices = @transform_4, window_bounds = array<i64: 16, 128>}]} {
    %c0 = arith.constant 0 : index
    %c0_0 = arith.constant 0 : index
    %c0_1 = arith.constant 0 : index
    %0 = vector.load %arg2[%c0, %c0_0, %c0_1] : memref<16x16x128xf32, #tpu.memory_space<vmem>>, vector<1x16x128xf32>
    %1 = vector.shape_cast %0 : vector<1x16x128xf32> to vector<16x128xf32>
    %c0_2 = arith.constant 0 : index
    %2 = memref.load %arg3[%c0_2] : memref<16xf32, #tpu.memory_space<smem>>
    %3 = vector.broadcast %2 : f32 to vector<16x128xf32>
    %4 = arith.mulf %1, %3 : vector<16x128xf32>
    %c1 = arith.constant 1 : index
    %c0_3 = arith.constant 0 : index
    %c0_4 = arith.constant 0 : index
    %5 = vector.load %arg2[%c1, %c0_3, %c0_4] : memref<16x16x128xf32, #tpu.memory_space<vmem>>, vector<1x16x128xf32>
    %6 = vector.shape_cast %5 : vector<1x16x128xf32> to vector<16x128xf32>
    %c1_5 = arith.constant 1 : index
    %7 = memref.load %arg3[%c1_5] : memref<16xf32, #tpu.memory_space<smem>>
    %8 = vector.broadcast %7 : f32 to vector<16x128xf32>
    %9 = arith.mulf %6, %8 : vector<16x128xf32>
    %10 = arith.addf %4, %9 : vector<16x128xf32>
    %c2 = arith.constant 2 : index
    %c0_6 = arith.constant 0 : index
    %c0_7 = arith.constant 0 : index
    %11 = vector.load %arg2[%c2, %c0_6, %c0_7] : memref<16x16x128xf32, #tpu.memory_space<vmem>>, vector<1x16x128xf32>
    %12 = vector.shape_cast %11 : vector<1x16x128xf32> to vector<16x128xf32>
    %c2_8 = arith.constant 2 : index
    %13 = memref.load %arg3[%c2_8] : memref<16xf32, #tpu.memory_space<smem>>
    %14 = vector.broadcast %13 : f32 to vector<16x128xf32>
    %15 = arith.mulf %12, %14 : vector<16x128xf32>
    %16 = arith.addf %10, %15 : vector<16x128xf32>
    %c3 = arith.constant 3 : index
    %c0_9 = arith.constant 0 : index
    %c0_10 = arith.constant 0 : index
    %17 = vector.load %arg2[%c3, %c0_9, %c0_10] : memref<16x16x128xf32, #tpu.memory_space<vmem>>, vector<1x16x128xf32>
    %18 = vector.shape_cast %17 : vector<1x16x128xf32> to vector<16x128xf32>
    %c3_11 = arith.constant 3 : index
    %19 = memref.load %arg3[%c3_11] : memref<16xf32, #tpu.memory_space<smem>>
    %20 = vector.broadcast %19 : f32 to vector<16x128xf32>
    %21 = arith.mulf %18, %20 : vector<16x128xf32>
    %22 = arith.addf %16, %21 : vector<16x128xf32>
    %c4 = arith.constant 4 : index
    %c0_12 = arith.constant 0 : index
    %c0_13 = arith.constant 0 : index
    %23 = vector.load %arg2[%c4, %c0_12, %c0_13] : memref<16x16x128xf32, #tpu.memory_space<vmem>>, vector<1x16x128xf32>
    %24 = vector.shape_cast %23 : vector<1x16x128xf32> to vector<16x128xf32>
    %c4_14 = arith.constant 4 : index
    %25 = memref.load %arg3[%c4_14] : memref<16xf32, #tpu.memory_space<smem>>
    %26 = vector.broadcast %25 : f32 to vector<16x128xf32>
    %27 = arith.mulf %24, %26 : vector<16x128xf32>
    %28 = arith.addf %22, %27 : vector<16x128xf32>
    %c5 = arith.constant 5 : index
    %c0_15 = arith.constant 0 : index
    %c0_16 = arith.constant 0 : index
    %29 = vector.load %arg2[%c5, %c0_15, %c0_16] : memref<16x16x128xf32, #tpu.memory_space<vmem>>, vector<1x16x128xf32>
    %30 = vector.shape_cast %29 : vector<1x16x128xf32> to vector<16x128xf32>
    %c5_17 = arith.constant 5 : index
    %31 = memref.load %arg3[%c5_17] : memref<16xf32, #tpu.memory_space<smem>>
    %32 = vector.broadcast %31 : f32 to vector<16x128xf32>
    %33 = arith.mulf %30, %32 : vector<16x128xf32>
    %34 = arith.addf %28, %33 : vector<16x128xf32>
    %c6 = arith.constant 6 : index
    %c0_18 = arith.constant 0 : index
    %c0_19 = arith.constant 0 : index
    %35 = vector.load %arg2[%c6, %c0_18, %c0_19] : memref<16x16x128xf32, #tpu.memory_space<vmem>>, vector<1x16x128xf32>
    %36 = vector.shape_cast %35 : vector<1x16x128xf32> to vector<16x128xf32>
    %c6_20 = arith.constant 6 : index
    %37 = memref.load %arg3[%c6_20] : memref<16xf32, #tpu.memory_space<smem>>
    %38 = vector.broadcast %37 : f32 to vector<16x128xf32>
    %39 = arith.mulf %36, %38 : vector<16x128xf32>
    %40 = arith.addf %34, %39 : vector<16x128xf32>
    %c7 = arith.constant 7 : index
    %c0_21 = arith.constant 0 : index
    %c0_22 = arith.constant 0 : index
    %41 = vector.load %arg2[%c7, %c0_21, %c0_22] : memref<16x16x128xf32, #tpu.memory_space<vmem>>, vector<1x16x128xf32>
    %42 = vector.shape_cast %41 : vector<1x16x128xf32> to vector<16x128xf32>
    %c7_23 = arith.constant 7 : index
    %43 = memref.load %arg3[%c7_23] : memref<16xf32, #tpu.memory_space<smem>>
    %44 = vector.broadcast %43 : f32 to vector<16x128xf32>
    %45 = arith.mulf %42, %44 : vector<16x128xf32>
    %46 = arith.addf %40, %45 : vector<16x128xf32>
    %c8 = arith.constant 8 : index
    %c0_24 = arith.constant 0 : index
    %c0_25 = arith.constant 0 : index
    %47 = vector.load %arg2[%c8, %c0_24, %c0_25] : memref<16x16x128xf32, #tpu.memory_space<vmem>>, vector<1x16x128xf32>
    %48 = vector.shape_cast %47 : vector<1x16x128xf32> to vector<16x128xf32>
    %c8_26 = arith.constant 8 : index
    %49 = memref.load %arg3[%c8_26] : memref<16xf32, #tpu.memory_space<smem>>
    %50 = vector.broadcast %49 : f32 to vector<16x128xf32>
    %51 = arith.mulf %48, %50 : vector<16x128xf32>
    %52 = arith.addf %46, %51 : vector<16x128xf32>
    %c9 = arith.constant 9 : index
    %c0_27 = arith.constant 0 : index
    %c0_28 = arith.constant 0 : index
    %53 = vector.load %arg2[%c9, %c0_27, %c0_28] : memref<16x16x128xf32, #tpu.memory_space<vmem>>, vector<1x16x128xf32>
    %54 = vector.shape_cast %53 : vector<1x16x128xf32> to vector<16x128xf32>
    %c9_29 = arith.constant 9 : index
    %55 = memref.load %arg3[%c9_29] : memref<16xf32, #tpu.memory_space<smem>>
    %56 = vector.broadcast %55 : f32 to vector<16x128xf32>
    %57 = arith.mulf %54, %56 : vector<16x128xf32>
    %58 = arith.addf %52, %57 : vector<16x128xf32>
    %c10 = arith.constant 10 : index
    %c0_30 = arith.constant 0 : index
    %c0_31 = arith.constant 0 : index
    %59 = vector.load %arg2[%c10, %c0_30, %c0_31] : memref<16x16x128xf32, #tpu.memory_space<vmem>>, vector<1x16x128xf32>
    %60 = vector.shape_cast %59 : vector<1x16x128xf32> to vector<16x128xf32>
    %c10_32 = arith.constant 10 : index
    %61 = memref.load %arg3[%c10_32] : memref<16xf32, #tpu.memory_space<smem>>
    %62 = vector.broadcast %61 : f32 to vector<16x128xf32>
    %63 = arith.mulf %60, %62 : vector<16x128xf32>
    %64 = arith.addf %58, %63 : vector<16x128xf32>
    %c11 = arith.constant 11 : index
    %c0_33 = arith.constant 0 : index
    %c0_34 = arith.constant 0 : index
    %65 = vector.load %arg2[%c11, %c0_33, %c0_34] : memref<16x16x128xf32, #tpu.memory_space<vmem>>, vector<1x16x128xf32>
    %66 = vector.shape_cast %65 : vector<1x16x128xf32> to vector<16x128xf32>
    %c11_35 = arith.constant 11 : index
    %67 = memref.load %arg3[%c11_35] : memref<16xf32, #tpu.memory_space<smem>>
    %68 = vector.broadcast %67 : f32 to vector<16x128xf32>
    %69 = arith.mulf %66, %68 : vector<16x128xf32>
    %70 = arith.addf %64, %69 : vector<16x128xf32>
    %c12 = arith.constant 12 : index
    %c0_36 = arith.constant 0 : index
    %c0_37 = arith.constant 0 : index
    %71 = vector.load %arg2[%c12, %c0_36, %c0_37] : memref<16x16x128xf32, #tpu.memory_space<vmem>>, vector<1x16x128xf32>
    %72 = vector.shape_cast %71 : vector<1x16x128xf32> to vector<16x128xf32>
    %c12_38 = arith.constant 12 : index
    %73 = memref.load %arg3[%c12_38] : memref<16xf32, #tpu.memory_space<smem>>
    %74 = vector.broadcast %73 : f32 to vector<16x128xf32>
    %75 = arith.mulf %72, %74 : vector<16x128xf32>
    %76 = arith.addf %70, %75 : vector<16x128xf32>
    %c13 = arith.constant 13 : index
    %c0_39 = arith.constant 0 : index
    %c0_40 = arith.constant 0 : index
    %77 = vector.load %arg2[%c13, %c0_39, %c0_40] : memref<16x16x128xf32, #tpu.memory_space<vmem>>, vector<1x16x128xf32>
    %78 = vector.shape_cast %77 : vector<1x16x128xf32> to vector<16x128xf32>
    %c13_41 = arith.constant 13 : index
    %79 = memref.load %arg3[%c13_41] : memref<16xf32, #tpu.memory_space<smem>>
    %80 = vector.broadcast %79 : f32 to vector<16x128xf32>
    %81 = arith.mulf %78, %80 : vector<16x128xf32>
    %82 = arith.addf %76, %81 : vector<16x128xf32>
    %c14 = arith.constant 14 : index
    %c0_42 = arith.constant 0 : index
    %c0_43 = arith.constant 0 : index
    %83 = vector.load %arg2[%c14, %c0_42, %c0_43] : memref<16x16x128xf32, #tpu.memory_space<vmem>>, vector<1x16x128xf32>
    %84 = vector.shape_cast %83 : vector<1x16x128xf32> to vector<16x128xf32>
    %c14_44 = arith.constant 14 : index
    %85 = memref.load %arg3[%c14_44] : memref<16xf32, #tpu.memory_space<smem>>
    %86 = vector.broadcast %85 : f32 to vector<16x128xf32>
    %87 = arith.mulf %84, %86 : vector<16x128xf32>
    %88 = arith.addf %82, %87 : vector<16x128xf32>
    %c15 = arith.constant 15 : index
    %c0_45 = arith.constant 0 : index
    %c0_46 = arith.constant 0 : index
    %89 = vector.load %arg2[%c15, %c0_45, %c0_46] : memref<16x16x128xf32, #tpu.memory_space<vmem>>, vector<1x16x128xf32>
    %90 = vector.shape_cast %89 : vector<1x16x128xf32> to vector<16x128xf32>
    %c15_47 = arith.constant 15 : index
    %91 = memref.load %arg3[%c15_47] : memref<16xf32, #tpu.memory_space<smem>>
    %92 = vector.broadcast %91 : f32 to vector<16x128xf32>
    %93 = arith.mulf %90, %92 : vector<16x128xf32>
    %94 = arith.addf %88, %93 : vector<16x128xf32>
    %c0_48 = arith.constant 0 : index
    %95 = memref.load %arg4[%c0_48] : memref<1xf32, #tpu.memory_space<smem>>
    %96 = vector.broadcast %95 : f32 to vector<16x128xf32>
    %97 = arith.addf %94, %96 : vector<16x128xf32>
    %c0_49 = arith.constant 0 : index
    %c0_50 = arith.constant 0 : index
    %98 = vector.load %arg1[%c0_49, %c0_50] : memref<16x128xf32, #tpu.memory_space<vmem>>, vector<16x128xf32>
    %99 = arith.mulf %98, %97 : vector<16x128xf32>
    %cst = arith.constant dense<0xFF800000> : vector<128xf32>
    %100 = vector.multi_reduction <maximumf>, %99, %cst [0] : vector<16x128xf32> to vector<128xf32>
    %101 = vector.shape_cast %100 : vector<128xf32> to vector<1x128xf32>
    %102 = vector.broadcast %101 : vector<1x128xf32> to vector<16x128xf32>
    %103 = arith.subf %99, %102 : vector<16x128xf32>
    %104 = math.exp %103 : vector<16x128xf32>
    %c0_51 = arith.constant 0 : index
    %c0_52 = arith.constant 0 : index
    %105 = vector.load %arg5[%c0_51, %c0_52] : memref<16x128xf32, #tpu.memory_space<vmem>>, vector<16x128xf32>
    tpu.vector_store %arg5[%c0_51, %c0_52], %104 {strides = array<i32>} : memref<16x128xf32, #tpu.memory_space<vmem>>, vector<16x128xf32>,
    return
  }
  func.func @transform_0(%arg0: i32) -> (i32, i32) {
    %c0_i32 = arith.constant 0 : i32
    %c0_i32_0 = arith.constant 0 : i32
    return %c0_i32, %arg0 : i32, i32
  }
  func.func @transform_1(%arg0: i32) -> (i32, i32, i32) {
    %c0_i32 = arith.constant 0 : i32
    %c0_i32_0 = arith.constant 0 : i32
    %c0_i32_1 = arith.constant 0 : i32
    return %c0_i32, %c0_i32_0, %arg0 : i32, i32, i32
  }
  func.func @transform_2(%arg0: i32) -> i32 {
    %c0_i32 = arith.constant 0 : i32
    %c0_i32_0 = arith.constant 0 : i32
    return %c0_i32 : i32
  }
  func.func @transform_3(%arg0: i32) -> i32 {
    %c0_i32 = arith.constant 0 : i32
    %c0_i32_0 = arith.constant 0 : i32
    return %c0_i32 : i32
  }
  func.func @transform_4(%arg0: i32) -> (i32, i32) {
    %c0_i32 = arith.constant 0 : i32
    %c0_i32_0 = arith.constant 0 : i32
    return %c0_i32, %arg0 : i32, i32
  }
}

</mosaic_0001>

<llo_original>
// kernel: control_attention_t.1
$region0: #{control_attention_t.1}
  #allocation0 [shape = 'u32[]', space=smem, size = 0x4, offset = 0x4, fixed_abs, tag = 'smem constant byte address 0x4 - core index']
  #allocation1 [shape = 'u32[144,128]{1,0:T(1,128)}', space=vmem, size = 0x12000, scoped, tag = 'internal scratch']
  #allocation2 [shape = 'f32[1]{0:T(128)S(6)}', space=smem, size = 0x200, scoped, tag = 'scoped memory for control_attention_t.1']
  %s0 = inlined_call_operand.vmem [shape: f32[16,128], index: 0, kind: input, shape index: {}]
  %s1 = inlined_call_operand.vmem [shape: f32[16,16,128], index: 1, kind: input, shape index: {}]
  %s2 = inlined_call_operand.vmem [shape: f32[16], index: 2, kind: input, shape index: {}]
  %s3 = inlined_call_operand.<no memory space> [shape: f32[1], index: 3, kind: input, shape index: {}]
  %s4 = inlined_call_operand.vmem [shape: f32[16,128], index: 4, kind: output, shape index: {}]
  %s5 = sld [smem:[#allocation0]]
  $region30: #{control_attention_t.1} parent=0
    _
  %s7 = ssub.s32 1, %s5
  %s8 = scalar_select 0, %s7, %s5
  %9 = sst [smem:[#allocation2]] %s3
  $region1: #{control_attention_t.1} parent=0
    #allocation3 [shape = 'u8[512]{0}', space=smem, size = 0x200, scoped, tag = 'input window, operand 2, single buffered']
    #allocation4 [shape = 's32[1]{0}', space=sflag, size = 0x4, scoped, tag = 'scoped memory for control_attention_t.1']
    %10 = vsyncpa [#allocation4], 0
    // Predicated region
    $region2: #{control_attention_t.1} parent=1 // pred_check
      _
    $region3: #{control_attention_t.1} parent=1 // pred_check_branch
      %12 = sbr.rel (0) target = $region5
    $region4: #{control_attention_t.1} parent=1 // pred_region
      _
    $region5: #{control_attention_t.1} parent=1 // pred_fallthru
      _
    // Predicated region
    $region6: #{control_attention_t.1} parent=1 // pred_check
      _
    $region7: #{control_attention_t.1} parent=1 // pred_check_branch
      %14 = sbr.rel (0) target = $region9
    $region8: #{control_attention_t.1} parent=1 // pred_region
      _
    $region9: #{control_attention_t.1} parent=1 // pred_fallthru
      _
    // Predicated region
    $region10: #{control_attention_t.1} parent=1 // pred_check
      _
    $region11: #{control_attention_t.1} parent=1 // pred_check_branch
      %16 = sbr.rel (0) target = $region13
    $region12: #{control_attention_t.1} parent=1 // pred_region
      %s18 = ssub.s32 16, 16
      %19 = vsyncadd [#allocation4], %s18
      %s21 = sshll.u32 %s2, 4
      %s22 = int_to_ptr.vmem [resolvable:$true] %s21
      %24 = dma.vmem_to_smem %s22, 16, [#allocation3], [#allocation4]
    $region13: #{control_attention_t.1} parent=1 // pred_fallthru
      _
    // Predicated region
    $region14: #{control_attention_t.1} parent=1 // pred_check
      _
    $region15: #{control_attention_t.1} parent=1 // pred_check_branch
      %26 = sbr.rel (0) target = $region17
    $region16: #{control_attention_t.1} parent=1 // pred_region
      _
    $region17: #{control_attention_t.1} parent=1 // pred_fallthru
      _
    // Predicated region
    $region18: #{control_attention_t.1} parent=1 // pred_check
      _
    $region19: #{control_attention_t.1} parent=1 // pred_check_branch
      %28 = sbr.rel (0) target = $region21
    $region20: #{control_attention_t.1} parent=1 // pred_region
      %29 = dma.done [#allocation4], 16
    $region21: #{control_attention_t.1} parent=1 // pred_fallthru
      _
    %30 = sfence
    %v31 = vld [vmem:[%s1] sm:$0xff]
    %v32 = vld [vmem:[%s1 + $0x8] sm:$0xff]
    %s33 = sld [smem:[#allocation3]]
    %v34 = vstv %s33
    %v35 = vmul.f32 %v31, %v34
    %v36 = vmul.f32 %v32, %v34
    %s37 = scalar_lea.vmem %s1, 16
    %v38 = vld [vmem:[%s37] sm:$0xff]
    %v39 = vld [vmem:[%s37 + $0x8] sm:$0xff]
    %s40 = sld [smem:[#allocation3 + $0x1]]
    %v41 = vstv %s40
    %v42 = vmul.f32 %v38, %v41
    %v43 = vmul.f32 %v39, %v41
    %v44 = vadd.f32 %v35, %v42
    %v45 = vadd.f32 %v36, %v43
    %s46 = scalar_lea.vmem %s1, 32
    %v47 = vld [vmem:[%s46] sm:$0xff]
    %v48 = vld [vmem:[%s46 + $0x8] sm:$0xff]
    %s49 = sld [smem:[#allocation3 + $0x2]]
    %v50 = vstv %s49
    %v51 = vmul.f32 %v47, %v50
    %v52 = vmul.f32 %v48, %v50
    %v53 = vadd.f32 %v44, %v51
    %v54 = vadd.f32 %v45, %v52
    %s55 = scalar_lea.vmem %s1, 48
    %v56 = vld [vmem:[%s55] sm:$0xff]
    %v57 = vld [vmem:[%s55 + $0x8] sm:$0xff]
    %s58 = sld [smem:[#allocation3 + $0x3]]
    %v59 = vstv %s58
    %v60 = vmul.f32 %v56, %v59
    %v61 = vmul.f32 %v57, %v59
    %v62 = vadd.f32 %v53, %v60
    %v63 = vadd.f32 %v54, %v61
    %s64 = scalar_lea.vmem %s1, 64
    %v65 = vld [vmem:[%s64] sm:$0xff]
    %v66 = vld [vmem:[%s64 + $0x8] sm:$0xff]
    %s67 = sld [smem:[#allocation3 + $0x4]]
    %v68 = vstv %s67
    %v69 = vmul.f32 %v65, %v68
    %v70 = vmul.f32 %v66, %v68
    %v71 = vadd.f32 %v62, %v69
    %v72 = vadd.f32 %v63, %v70
    %s73 = scalar_lea.vmem %s1, 80
    %v74 = vld [vmem:[%s73] sm:$0xff]
    %v75 = vld [vmem:[%s73 + $0x8] sm:$0xff]
    %s76 = sld [smem:[#allocation3 + $0x5]]
    %v77 = vstv %s76
    %v78 = vmul.f32 %v74, %v77
    %v79 = vmul.f32 %v75, %v77
    %v80 = vadd.f32 %v71, %v78
    %v81 = vadd.f32 %v72, %v79
    %s82 = scalar_lea.vmem %s1, 96
    %v83 = vld [vmem:[%s82] sm:$0xff]
    %v84 = vld [vmem:[%s82 + $0x8] sm:$0xff]
    %s85 = sld [smem:[#allocation3 + $0x6]]
    %v86 = vstv %s85
    %v87 = vmul.f32 %v83, %v86
    %v88 = vmul.f32 %v84, %v86
    %v89 = vadd.f32 %v80, %v87
    %v90 = vadd.f32 %v81, %v88
    %s91 = scalar_lea.vmem %s1, 112
    %v92 = vld [vmem:[%s91] sm:$0xff]
    %v93 = vld [vmem:[%s91 + $0x8] sm:$0xff]
    %s94 = sld [smem:[#allocation3 + $0x7]]
    %v95 = vstv %s94
    %v96 = vmul.f32 %v92, %v95
    %v97 = vmul.f32 %v93, %v95
    %v98 = vadd.f32 %v89, %v96
    %v99 = vadd.f32 %v90, %v97
    %s100 = scalar_lea.vmem %s1, 128
    %v101 = vld [vmem:[%s100] sm:$0xff]
    %v102 = vld [vmem:[%s100 + $0x8] sm:$0xff]
    %s103 = sld [smem:[#allocation3 + $0x8]]
    %v104 = vstv %s103
    %v105 = vmul.f32 %v101, %v104
    %v106 = vmul.f32 %v102, %v104
    %v107 = vadd.f32 %v98, %v105
    %v108 = vadd.f32 %v99, %v106
    %s109 = scalar_lea.vmem %s1, 144
    %v110 = vld [vmem:[%s109] sm:$0xff]
    %v111 = vld [vmem:[%s109 + $0x8] sm:$0xff]
    %s112 = sld [smem:[#allocation3 + $0x9]]
    %v113 = vstv %s112
    %v114 = vmul.f32 %v110, %v113
    %v115 = vmul.f32 %v111, %v113
    %v116 = vadd.f32 %v107, %v114
    %v117 = vadd.f32 %v108, %v115
    %s118 = scalar_lea.vmem %s1, 160
    %v119 = vld [vmem:[%s118] sm:$0xff]
    %v120 = vld [vmem:[%s118 + $0x8] sm:$0xff]
    %s121 = sld [smem:[#allocation3 + $0xa]]
    %v122 = vstv %s121
    %v123 = vmul.f32 %v119, %v122
    %v124 = vmul.f32 %v120, %v122
    %v125 = vadd.f32 %v116, %v123
    %v126 = vadd.f32 %v117, %v124
    %s127 = scalar_lea.vmem %s1, 176
    %v128 = vld [vmem:[%s127] sm:$0xff]
    %v129 = vld [vmem:[%s127 + $0x8] sm:$0xff]
    %s130 = sld [smem:[#allocation3 + $0xb]]
    %v131 = vstv %s130
    %v132 = vmul.f32 %v128, %v131
    %v133 = vmul.f32 %v129, %v131
    %v134 = vadd.f32 %v125, %v132
    %v135 = vadd.f32 %v126, %v133
    %s136 = scalar_lea.vmem %s1, 192
    %v137 = vld [vmem:[%s136] sm:$0xff]
    %v138 = vld [vmem:[%s136 + $0x8] sm:$0xff]
    %s139 = sld [smem:[#allocation3 + $0xc]]
    %v140 = vstv %s139
    %v141 = vmul.f32 %v137, %v140
    %v142 = vmul.f32 %v138, %v140
    %v143 = vadd.f32 %v134, %v141
    %v144 = vadd.f32 %v135, %v142
    %s145 = scalar_lea.vmem %s1, 208
    %v146 = vld [vmem:[%s145] sm:$0xff]
    %v147 = vld [vmem:[%s145 + $0x8] sm:$0xff]
    %s148 = sld [smem:[#allocation3 + $0xd]]
    %v149 = vstv %s148
    %v150 = vmul.f32 %v146, %v149
    %v151 = vmul.f32 %v147, %v149
    %v152 = vadd.f32 %v143, %v150
    %v153 = vadd.f32 %v144, %v151
    %s154 = scalar_lea.vmem %s1, 224
    %v155 = vld [vmem:[%s154] sm:$0xff]
    %v156 = vld [vmem:[%s154 + $0x8] sm:$0xff]
    %s157 = sld [smem:[#allocation3 + $0xe]]
    %v158 = vstv %s157
    %v159 = vmul.f32 %v155, %v158
    %v160 = vmul.f32 %v156, %v158
    %v161 = vadd.f32 %v152, %v159
    %v162 = vadd.f32 %v153, %v160
    %s163 = scalar_lea.vmem %s1, 240
    %v164 = vld [vmem:[%s163] sm:$0xff]
    %v165 = vld [vmem:[%s163 + $0x8] sm:$0xff]
    %s166 = sld [smem:[#allocation3 + $0xf]]
    %v167 = vstv %s166
    %v168 = vmul.f32 %v164, %v167
    %v169 = vmul.f32 %v165, %v167
    %v170 = vadd.f32 %v161, %v168
    %v171 = vadd.f32 %v162, %v169
    %s172 = sld [smem:[#allocation2]]
    %v173 = vstv %s172
    %v174 = vadd.f32 %v170, %v173
    %v175 = vadd.f32 %v171, %v173
    %v176 = vld [vmem:[%s0] sm:$0xff]
    %v177 = vld [vmem:[%s0 + $0x8] sm:$0xff]
    %v178 = vmul.f32 %v176, %v174
    %v179 = vmul.f32 %v177, %v175
    %v180 = vmax.f32 %v178, %v179
    %v181 = vrot.slane %v180, 4
    %v182 = vmax.f32 %v180, %v181
    %v183 = vrot.slane %v182, 2
    %v184 = vmax.f32 %v182, %v183
    %v185 = vrot.slane %v184, 1
    %v186 = vmax.f32 %v184, %v185
    %v187 = vsub.f32 %v178, %v186
    %v188 = vsub.f32 %v179, %v186
    %v189 = vmul.f32 %v187, 1.442695
    %v190 = vpow.pop %v189
    %v191 = vmul.f32 %v188, 1.442695
    %v192 = vpow.pop %v191
    %193 = vst [vmem:[%s4] sm:$0xff] %v190
    %194 = vst [vmem:[%s4 + $0x8] sm:$0xff] %v192
    // Predicated region
    $region22: #{control_attention_t.1} parent=1 // pred_check
      _
    $region23: #{control_attention_t.1} parent=1 // pred_check_branch
      %196 = sbr.rel (0) target = $region25
    $region24: #{control_attention_t.1} parent=1 // pred_region
      _
    $region25: #{control_attention_t.1} parent=1 // pred_fallthru
      _
    // Predicated region
    $region26: #{control_attention_t.1} parent=1 // pred_check
      _
    $region27: #{control_attention_t.1} parent=1 // pred_check_branch
      %198 = sbr.rel (0) target = $region29
    $region28: #{control_attention_t.1} parent=1 // pred_region
      _
    $region29: #{control_attention_t.1} parent=1 // pred_fallthru
      _
    %199 = vsyncpa [#allocation4], 1

</llo_original>
